<compile_context>
chip_gen: v5e
topology: v5e:2x2
jax: 0.10.0
libtpu: 0.0.40
codegen_flags: <defaults>
</compile_context>

<pallas_src>
import math

import jax
import jax.numpy as jnp
from jax import lax
from jax.experimental import pallas as pl
from jax.experimental.pallas import tpu as pltpu

# ---- model dimensions (match the PyTorch module) ----------------------------
F_IN = 1433           # Cora feature dim (hard-coded in the module)
H1, F1 = 8, 8         # conv1: GATConv(1433, 8, heads=8)  -> concat -> 64
HF1 = H1 * F1         # 64
F2 = 7                # conv2: GATConv(64, 7, heads=1, concat=False)
NEG_SLOPE = 0.2       # PyG GATConv default LeakyReLU slope


def _round_up(v, m):
    return ((v + m - 1) // m) * m


def _default_tm_max():
    """Destination-row tile: 128 on v7x (64 MiB VMEM/TC), 256 on v5e/v6e."""
    try:
        kind = jax.devices()[0].device_kind.lower()
    except Exception:
        return 256
    return 128 if "v7" in kind else 256


def _choose_tile(n, tm_max):
    # 32-row granularity (int8 sublane tile); multi-tile TM is always a multiple
    # of 128 so sub-lane-blocked outputs like ssrc [1, tm] stay legal.
    if n >= tm_max:
        tm = tm_max
    else:
        tm = max(32, _round_up(n, 32))
    return tm, _round_up(n, tm)


def _vmem_limit_bytes(tm, n_pad):
    """Per-step footprint estimate (double-buffered streams + live f32 temporaries)."""
    adj_stream = 2 * tm * n_pad * 1            # int8 adj tile, double buffered
    h1_res = 2 * n_pad * HF1 * 2               # bf16 h1 (constant-index block)
    ssrc_res = 2 * H1 * n_pad * 4
    f32_tmps = 6 * tm * n_pad * 4              # adj cast + softmax temporaries
    est = adj_stream + h1_res + ssrc_res + f32_tmps + (2 << 20)
    return int(min(max(est, 32 * 1024 * 1024), 64 * 1024 * 1024))


# ----------------------------- kernels ---------------------------------------
def proj1_kernel(x_ref, w1_ref, asrc_ref, adst_ref, h1_ref, ssrc_ref, sdst_ref):
    """h1 = x @ W1 (bf16 MXU, f32 acc) + fused per-head attention scores.

    asrc/adst are [H1, HF1] block-diagonal, so one matmul produces every head's
    s_src / s_dst at once. h1 is written back as bf16 (feeds bf16 aggregation)."""
    h1 = jnp.dot(x_ref[...], w1_ref[...], preferred_element_type=jnp.float32)
    h1_ref[...] = h1.astype(h1_ref.dtype)                              # [TM, 64] bf16
    ssrc_ref[...] = lax.dot_general(asrc_ref[...], h1, (((1,), (1,)), ((), ())),
                                    preferred_element_type=jnp.float32)  # [H1, TM]
    sdst_ref[...] = lax.dot_general(h1, adst_ref[...], (((1,), (1,)), ((), ())),
                                    preferred_element_type=jnp.float32)  # [TM, H1]


def attn1_kernel(adj_ref, h1_ref, ssrc_ref, sdst_ref, b1_ref, w2_ref,
                 asrc2_ref, adst2_ref, h2_ref, ssrc2_ref, sdst2_ref):
    """Layer-1 masked softmax + aggregation + ELU for a tile of destination rows,
    fused with the layer-2 projection (h2 = ELU(agg+b1) @ W2) and its att scores."""
    adj = adj_ref[...].astype(jnp.float32)           # [TM, N]  0/1 mask (int8 in HBM)
    ssrc = ssrc_ref[...]                             # [H1, N]  f32
    sdst = sdst_ref[...]                             # [TM, H1] f32
    # monotone shift: max_n LeakyyReLU(sdst+ssrc) == LeakyReLU(sdst + max_n ssrc)
    smax = jnp.max(ssrc, axis=1, keepdims=True)      # [H1, 1]
    h2 = None
    for hh in range(H1):                             # unrolled per head
        raw = sdst[:, hh:hh + 1] + ssrc[hh:hh + 1, :]          # [TM, N]
        raw = jnp.maximum(raw, NEG_SLOPE * raw)                # LeakyReLU(0.2)
        sh = sdst[:, hh:hh + 1] + smax[hh:hh + 1, :]           # [TM, 1]
        sh = jnp.maximum(sh, NEG_SLOPE * sh)
        p = jnp.exp(raw - sh) * adj                            # exact 0 off-graph
        inv = pl.reciprocal(jnp.sum(p, axis=1, keepdims=True), approx=True)
        agg = jnp.dot(p.astype(jnp.bfloat16), h1_ref[:, hh * F1:(hh + 1) * F1],
                      preferred_element_type=jnp.float32) * inv        # [TM, F1]
        x1h = agg + b1_ref[:, hh * F1:(hh + 1) * F1]
        x1h = jnp.where(x1h > 0, x1h, jnp.exp(x1h) - 1.0)      # F.elu per head chunk
        contrib = jnp.dot(x1h, w2_ref[hh * F1:(hh + 1) * F1, :],
                          preferred_element_type=jnp.float32)  # [TM, F2]
        h2 = contrib if h2 is None else h2 + contrib
    h2_ref[...] = h2.astype(h2_ref.dtype)                               # [TM, F2] bf16
    ssrc2_ref[...] = lax.dot_general(asrc2_ref[...], h2, (((1,), (1,)), ((), ())),
                                     preferred_element_type=jnp.float32)  # [1, TM]
    sdst2_ref[...] = lax.dot_general(h2, adst2_ref[...], (((1,), (1,)), ((), ())),
                                     preferred_element_type=jnp.float32)  # [TM, 1]


def attn2_kernel(adj_ref, h2_ref, ssrc2_ref, sdst2_ref, b2_ref, out_ref):
    """Layer-2 masked softmax + aggregation + bias + log_softmax for a row tile."""
    adj = adj_ref[...].astype(jnp.float32)                     # [TM, N]
    ssrc2 = ssrc2_ref[...]                                     # [1, N]
    sdst2 = sdst2_ref[...]                                     # [TM, 1]
    smax = jnp.max(ssrc2, axis=1, keepdims=True)               # [1, 1]
    raw = sdst2 + ssrc2                                        # [TM, N]
    raw = jnp.maximum(raw, NEG_SLOPE * raw)
    sh = sdst2 + smax                                          # [TM, 1]
    sh = jnp.maximum(sh, NEG_SLOPE * sh)
    p = jnp.exp(raw - sh) * adj
    inv = pl.reciprocal(jnp.sum(p, axis=1, keepdims=True), approx=True)
    z = jnp.dot(p.astype(jnp.bfloat16), h2_ref[...],
                preferred_element_type=jnp.float32) * inv + b2_ref[...]   # [TM, F2]
    z = z - jnp.max(z, axis=1, keepdims=True)
    out_ref[...] = z - jnp.log(jnp.sum(jnp.exp(z), axis=1, keepdims=True))


# ----------------------------- wrapper ----------------------------------------
def gat_forward(x, adj, params, *, tm_max=None):
    n = x.shape[0]
    if tm_max is None:
        tm_max = _default_tm_max()
    tm, n_pad = _choose_tile(n, tm_max)
    grid = (n_pad // tm,)
    f_pad = _round_up(F_IN, 128)    # 1433 -> 1536

    cparams = pltpu.CompilerParams(
        dimension_semantics=("parallel",),
        vmem_limit_bytes=_vmem_limit_bytes(tm, n_pad))

    # ---- host-side padding / dtype prep (glue, not hot path) ----
    x_p = jnp.zeros((n_pad, f_pad), jnp.bfloat16).at[:n, :F_IN].set(
        x.astype(jnp.bfloat16))
    w1_p = jnp.zeros((f_pad, HF1), jnp.bfloat16).at[:F_IN, :].set(
        params["w1"].astype(jnp.bfloat16))

    adj_p = jnp.zeros((n_pad, n_pad), jnp.int8).at[:n, :n].set(
        adj.astype(jnp.int8))
    if n_pad > n:
        # self-loops on padded rows keep the softmax rowsum > 0 (no NaNs)
        idx = jnp.arange(n, n_pad)
        adj_p = adj_p.at[idx, idx].set(jnp.asarray(1, jnp.int8))

    # block-diagonal attention matrices: asrc_bd[h, h*F1+f] = att_src1[h, f]
    eye = jnp.eye(H1, dtype=jnp.float32)
    asrc_bd = (eye[:, :, None] * params["att_src1"][None, :, :]).reshape(H1, HF1)
    adst_bd = (eye[:, :, None] * params["att_dst1"][None, :, :]).reshape(H1, HF1)

    # ---- kernel A: feature projection + fused per-head attention scores ----
    # (HBM-bound on streaming x; TM keeps the x tile >= ~0.4 MB for DMA efficiency.)
    h1, ssrc1, sdst1 = pl.pallas_call(
        proj1_kernel,
        grid=grid,
        out_shape=(jax.ShapeDtypeStruct((n_pad, HF1), jnp.bfloat16),
                   jax.ShapeDtypeStruct((H1, n_pad), jnp.float32),
                   jax.ShapeDtypeStruct((n_pad, H1), jnp.float32)),
        in_specs=[pl.BlockSpec((tm, f_pad), lambda i: (i, 0)),
                  pl.BlockSpec((f_pad, HF1), lambda i: (0, 0)),
                  pl.BlockSpec((H1, HF1), lambda i: (0, 0)),
                  pl.BlockSpec((H1, HF1), lambda i: (0, 0))],
        out_specs=(pl.BlockSpec((tm, HF1), lambda i: (i, 0)),
                   pl.BlockSpec((H1, tm), lambda i: (0, i)),
                   pl.BlockSpec((tm, H1), lambda i: (i, 0))),
        compiler_params=cparams,
    )(x_p, w1_p, asrc_bd, adst_bd)

    # ---- kernel B: layer-1 attention softmax + aggregation + ELU + W2 proj ----
    h2, ssrc2, sdst2 = pl.pallas_call(
        attn1_kernel,
        grid=grid,
        out_shape=(jax.ShapeDtypeStruct((n_pad, F2), jnp.bfloat16),
                   jax.ShapeDtypeStruct((1, n_pad), jnp.float32),
                   jax.ShapeDtypeStruct((n_pad, 1), jnp.float32)),
        in_specs=[pl.BlockSpec((tm, n_pad), lambda i: (i, 0)),    # adj row slab (i8)
                  pl.BlockSpec((n_pad, HF1), lambda i: (0, 0)),   # h1 (full, bf16)
                  pl.BlockSpec((H1, n_pad), lambda i: (0, 0)),    # s_src1 (full)
                  pl.BlockSpec((tm, H1), lambda i: (i, 0)),       # s_dst1 (tile)
                  pl.BlockSpec((1, HF1), lambda i: (0, 0)),       # b1
                  pl.BlockSpec((HF1, F2), lambda i: (0, 0)),      # w2
                  pl.BlockSpec((1, F2), lambda i: (0, 0)),        # att_src2
                  pl.BlockSpec((1, F2), lambda i: (0, 0))],       # att_dst2
        out_specs=(pl.BlockSpec((tm, F2), lambda i: (i, 0)),
                   pl.BlockSpec((1, tm), lambda i: (0, i)),
                   pl.BlockSpec((tm, 1), lambda i: (i, 0))),
        compiler_params=cparams,
    )(adj_p, h1, ssrc1, sdst1, params["b1"], params["w2"],
      params["att_src2"], params["att_dst2"])

    # ---- kernel C: layer-2 attention + bias + log_softmax ----
    out = pl.pallas_call(
        attn2_kernel,
        grid=grid,
        out_shape=jax.ShapeDtypeStruct((n_pad, F2), jnp.float32),
        in_specs=[pl.BlockSpec((tm, n_pad), lambda i: (i, 0)),    # adj row slab (i8)
                  pl.BlockSpec((n_pad, F2), lambda i: (0, 0)),    # h2 (full, bf16)
                  pl.BlockSpec((1, n_pad), lambda i: (0, 0)),     # s_src2 (full)
                  pl.BlockSpec((tm, 1), lambda i: (i, 0)),        # s_dst2 (tile)
                  pl.BlockSpec((1, F2), lambda i: (0, 0))],       # b2
        out_specs=pl.BlockSpec((tm, F2), lambda i: (i, 0)),
        compiler_params=cparams,
    )(adj_p, h2, ssrc2, sdst2, params["b2"])

    return out[:n]


# ----------------------------- glue / setup ----------------------------------
def build_adj(edge_index, n):
    """Dense mask: adj[i, j] = 1 if edge j -> i (src=j, dst=i); self-loops added
    (PyG GATConv default). Self-loops guarantee every softmax row has rowsum > 0."""
    src, dst = edge_index[0], edge_index[1]
    adj = jnp.zeros((n, n), jnp.float32)
    adj = adj.at[dst, src].set(1.0)
    idx = jnp.arange(n)
    adj = adj.at[idx, idx].set(1.0)
    return adj


def init_params(key):
    ks = jax.random.split(key, 8)
    g1 = 1.0 / math.sqrt(F_IN)
    g2 = 1.0 / math.sqrt(HF1)
    return {
        "w1": jax.random.normal(ks[0], (F_IN, HF1), jnp.float32) * g1,
        "att_src1": jax.random.normal(ks[1], (H1, F1), jnp.float32) * 0.3,
        "att_dst1": jax.random.normal(ks[2], (H1, F1), jnp.float32) * 0.3,
        "b1": jnp.zeros((1, HF1), jnp.float32),          # PyG inits bias to zero
        "w2": jax.random.normal(ks[3], (HF1, F2), jnp.float32) * g2,
        "att_src2": jax.random.normal(ks[4], (1, F2), jnp.float32) * 0.3,
        "att_dst2": jax.random.normal(ks[5], (1, F2), jnp.float32) * 0.3,
        "b2": jnp.zeros((1, F2), jnp.float32),
    }


def gat_reference(x, adj, p):
    """Pure-JAX reference mirroring the kernel math (bf16 x/W1/h1/h2, eval mode).
    Row-max shift here equals the kernel's monotone-shift identity exactly."""
    hp = lax.Precision.HIGHEST
    xb = x.astype(jnp.bfloat16).astype(jnp.float32)
    w1b = p["w1"].astype(jnp.bfloat16).astype(jnp.float32)
    h1 = jnp.dot(xb, w1b, precision=hp)
    h1b = h1.astype(jnp.bfloat16).astype(jnp.float32)
    cols = []
    for hh in range(H1):
        hf = h1[:, hh * F1:(hh + 1) * F1]
        s_src = (hf * p["att_src1"][hh][None, :]).sum(-1)[None, :]
        s_dst = (hf * p["att_dst1"][hh][None, :]).sum(-1)[:, None]
        e = s_dst + s_src
        e = jnp.maximum(e, NEG_SLOPE * e)
        e = e - e.max(1, keepdims=True)
        pe = jnp.exp(e) * adj
        alpha = pe / pe.sum(1, keepdims=True)
        cols.append(jnp.dot(alpha, h1b[:, hh * F1:(hh + 1) * F1], precision=hp))
    x1 = jnp.concatenate(cols, axis=1) + p["b1"]
    x1 = jnp.where(x1 > 0, x1, jnp.exp(x1) - 1.0)
    h2 = jnp.dot(x1, p["w2"], precision=hp)
    h2b = h2.astype(jnp.bfloat16).astype(jnp.float32)
    s_src2 = (h2 * p["att_src2"]).sum(-1)[None, :]
    s_dst2 = (h2 * p["att_dst2"]).sum(-1)[:, None]
    e2 = s_dst2 + s_src2
    e2 = jnp.maximum(e2, NEG_SLOPE * e2)
    e2 = e2 - e2.max(1, keepdims=True)
    p2 = jnp.exp(e2) * adj
    alpha2 = p2 / p2.sum(1, keepdims=True)
    z = jnp.dot(alpha2, h2b, precision=hp) + p["b2"]
    z = z - z.max(1, keepdims=True)
    return z - jnp.log(jnp.exp(z).sum(1, keepdims=True))


if __name__ == "__main__":
    N, E = 16, 48  # small graph
    key = jax.random.PRNGKey(0)
    k_x, k_src, k_dst, k_par = jax.random.split(key, 4)

    x = jax.random.normal(k_x, (N, F_IN), jnp.float32)
    edge_index = jnp.stack([
        jax.random.randint(k_src, (E,), 0, N),
        jax.random.randint(k_dst, (E,), 0, N),
    ])
    adj = build_adj(edge_index, N)
    params = init_params(k_par)

    out = gat_forward(x, adj, params)
    out = jax.block_until_ready(out)

    assert out.shape == (N, F2) and bool(jnp.all(jnp.isfinite(out)))
    ref = gat_reference(x, adj, params)
    # tolerance covers bf16 MXU inputs (x/W1/h1/h2/p) + approx reciprocal softmax
    assert bool(jnp.allclose(out, ref, atol=3e-2, rtol=3e-2)), "mismatch vs JAX reference"
    print("KERNEL_OK")
</pallas_src>

<mosaic_0001>
module attributes {stable_mosaic.version = 11 : i64} {
  func.func @proj1_kernel(%arg0: i32, %arg1: memref<32x1536xbf16, #tpu.memory_space<vmem>>, %arg2: memref<1536x64xbf16, #tpu.memory_space<vmem>>, %arg3: memref<8x64xf32, #tpu.memory_space<vmem>>, %arg4: memref<8x64xf32, #tpu.memory_space<vmem>>, %arg5: memref<32x64xbf16, #tpu.memory_space<vmem>>, %arg6: memref<8x32xf32, #tpu.memory_space<vmem>>, %arg7: memref<32x8xf32, #tpu.memory_space<vmem>>) attributes {dimension_semantics = [#tpu.dimension_semantics<parallel>], iteration_bounds = array<i64: 1>, scalar_prefetch = 0 : i64, scratch_operands = 0 : i64, tpu.core_type = #tpu.core_type<tc>, window_params = [{transform_indices = @transform_0, window_bounds = array<i64: 32, 1536>}, {pipeline_mode = #tpu.pipeline_mode<synchronous>, transform_indices = @transform_1, window_bounds = array<i64: 1536, 64>}, {pipeline_mode = #tpu.pipeline_mode<synchronous>, transform_indices = @transform_2, window_bounds = array<i64: 8, 64>}, {pipeline_mode = #tpu.pipeline_mode<synchronous>, transform_indices = @transform_3, window_bounds = array<i64: 8, 64>}, {transform_indices = @transform_4, window_bounds = array<i64: 32, 64>}, {transform_indices = @transform_5, window_bounds = array<i64: 8, 32>}, {transform_indices = @transform_6, window_bounds = array<i64: 32, 8>}]} {
    %c0 = arith.constant 0 : index
    %c0_0 = arith.constant 0 : index
    %0 = vector.load %arg1[%c0, %c0_0] : memref<32x1536xbf16, #tpu.memory_space<vmem>>, vector<32x1536xbf16>
    %c0_1 = arith.constant 0 : index
    %c0_2 = arith.constant 0 : index
    %1 = vector.load %arg2[%c0_1, %c0_2] : memref<1536x64xbf16, #tpu.memory_space<vmem>>, vector<1536x64xbf16>
    %cst = arith.constant dense<0.000000e+00> : vector<32x64xf32>
    %2 = tpu.matmul %0, %1, %cst {dimension_numbers = #tpu.dot_dimension_numbers<[1], [0], [0], [1], [0, 0, 1, 1], [], []>} : vector<32x1536xbf16>, vector<1536x64xbf16>, vector<32x64xf32> -> vector<32x64xf32>
    %3 = arith.truncf %2 : vector<32x64xf32> to vector<32x64xbf16>
    %c0_3 = arith.constant 0 : index
    %c0_4 = arith.constant 0 : index
    %4 = vector.load %arg5[%c0_3, %c0_4] : memref<32x64xbf16, #tpu.memory_space<vmem>>, vector<32x64xbf16>
    tpu.vector_store %arg5[%c0_3, %c0_4], %3 {strides = array<i32>} : memref<32x64xbf16, #tpu.memory_space<vmem>>, vector<32x64xbf16>,
    %c0_5 = arith.constant 0 : index
    %c0_6 = arith.constant 0 : index
    %5 = vector.load %arg3[%c0_5, %c0_6] : memref<8x64xf32, #tpu.memory_space<vmem>>, vector<8x64xf32>
    %cst_7 = arith.constant dense<0.000000e+00> : vector<8x32xf32>
    %6 = tpu.matmul %5, %2, %cst_7 {dimension_numbers = #tpu.dot_dimension_numbers<[1], [1], [0], [0], [0, 0, 1, 0], [], []>} : vector<8x64xf32>, vector<32x64xf32>, vector<8x32xf32> -> vector<8x32xf32>
    %c0_8 = arith.constant 0 : index
    %c0_9 = arith.constant 0 : index
    %7 = vector.load %arg6[%c0_8, %c0_9] : memref<8x32xf32, #tpu.memory_space<vmem>>, vector<8x32xf32>
    tpu.vector_store %arg6[%c0_8, %c0_9], %6 {strides = array<i32>} : memref<8x32xf32, #tpu.memory_space<vmem>>, vector<8x32xf32>,
    %c0_10 = arith.constant 0 : index
    %c0_11 = arith.constant 0 : index
    %8 = vector.load %arg4[%c0_10, %c0_11] : memref<8x64xf32, #tpu.memory_space<vmem>>, vector<8x64xf32>
    %cst_12 = arith.constant dense<0.000000e+00> : vector<32x8xf32>
    %9 = tpu.matmul %2, %8, %cst_12 {dimension_numbers = #tpu.dot_dimension_numbers<[1], [1], [0], [0], [0, 0, 1, 0], [], []>} : vector<32x64xf32>, vector<8x64xf32>, vector<32x8xf32> -> vector<32x8xf32>
    %c0_13 = arith.constant 0 : index
    %c0_14 = arith.constant 0 : index
    %10 = vector.load %arg7[%c0_13, %c0_14] : memref<32x8xf32, #tpu.memory_space<vmem>>, vector<32x8xf32>
    tpu.vector_store %arg7[%c0_13, %c0_14], %9 {strides = array<i32>} : memref<32x8xf32, #tpu.memory_space<vmem>>, vector<32x8xf32>,
    return
  }
  func.func @transform_0(%arg0: i32) -> (i32, i32) {
    %c0_i32 = arith.constant 0 : i32
    %c0_i32_0 = arith.constant 0 : i32
    return %arg0, %c0_i32 : i32, i32
  }
  func.func @transform_1(%arg0: i32) -> (i32, i32) {
    %c0_i32 = arith.constant 0 : i32
    %c0_i32_0 = arith.constant 0 : i32
    %c0_i32_1 = arith.constant 0 : i32
    return %c0_i32, %c0_i32_0 : i32, i32
  }
  func.func @transform_2(%arg0: i32) -> (i32, i32) {
    %c0_i32 = arith.constant 0 : i32
    %c0_i32_0 = arith.constant 0 : i32
    %c0_i32_1 = arith.constant 0 : i32
    return %c0_i32, %c0_i32_0 : i32, i32
  }
  func.func @transform_3(%arg0: i32) -> (i32, i32) {
    %c0_i32 = arith.constant 0 : i32
    %c0_i32_0 = arith.constant 0 : i32
    %c0_i32_1 = arith.constant 0 : i32
    return %c0_i32, %c0_i32_0 : i32, i32
  }
  func.func @transform_4(%arg0: i32) -> (i32, i32) {
    %c0_i32 = arith.constant 0 : i32
    %c0_i32_0 = arith.constant 0 : i32
    return %arg0, %c0_i32 : i32, i32
  }
  func.func @transform_5(%arg0: i32) -> (i32, i32) {
    %c0_i32 = arith.constant 0 : i32
    %c0_i32_0 = arith.constant 0 : i32
    return %c0_i32, %arg0 : i32, i32
  }
  func.func @transform_6(%arg0: i32) -> (i32, i32) {
    %c0_i32 = arith.constant 0 : i32
    %c0_i32_0 = arith.constant 0 : i32
    return %arg0, %c0_i32 : i32, i32
  }
}

</mosaic_0001>

<llo_original>
// kernel: tpu_custom_call.1
$region0: #{tpu_custom_call.1}
  #allocation0 [shape = 'u32[]', space=smem, size = 0x4, offset = 0x4, fixed_abs, tag = 'smem constant byte address 0x4 - core index']
  #allocation1 [shape = 'u32[72,128]{1,0:T(1,128)}', space=vmem, size = 0x9000, scoped, tag = 'internal scratch']
  %s0 = inlined_call_operand.vmem [shape: bf16[32,1536], index: 0, kind: input, shape index: {}]
  %s1 = inlined_call_operand.vmem [shape: bf16[1536,64], index: 1, kind: input, shape index: {}]
  %s2 = inlined_call_operand.vmem [shape: f32[8,64], index: 2, kind: input, shape index: {}]
  %s3 = inlined_call_operand.vmem [shape: f32[8,64], index: 3, kind: input, shape index: {}]
  %s4 = inlined_call_operand.hbm [shape: bf16[32,64], index: 4, kind: output, shape index: {0}]
  %s5 = inlined_call_operand.hbm [shape: f32[8,32], index: 5, kind: output, shape index: {1}]
  %s6 = inlined_call_operand.vmem [shape: f32[32,8], index: 6, kind: output, shape index: {2}]
  %7 = xla_tuple %s4, %s5, %s6
  %s8 = sld [smem:[#allocation0]]
  $region42: #{tpu_custom_call.1} parent=0
    _
  %s10 = ssub.s32 1, %s8
  %s11 = scalar_select 0, %s10, %s8
  $region1: #{tpu_custom_call.1} parent=0
    #allocation2 [shape = 'u8[8192]{0}', space=vmem, size = 0x2000, scoped, tag = 'output window, operand 0, single buffered']
    #allocation3 [shape = 's32[1]{0}', space=sflag, size = 0x4, scoped, tag = 'scoped memory for tpu_custom_call.1']
    #allocation4 [shape = 'u8[4096]{0}', space=vmem, size = 0x1000, scoped, tag = 'output window, operand 1, single buffered']
    #allocation5 [shape = 's32[1]{0}', space=sflag, size = 0x4, scoped, tag = 'scoped memory for tpu_custom_call.1']
    %12 = vsyncpa [#allocation3], 0
    %13 = vsyncpa [#allocation5], 0
    // Predicated region
    $region2: #{tpu_custom_call.1} parent=1 // pred_check
      _
    $region3: #{tpu_custom_call.1} parent=1 // pred_check_branch
      %15 = sbr.rel (0) target = $region5
    $region4: #{tpu_custom_call.1} parent=1 // pred_region
      _
    $region5: #{tpu_custom_call.1} parent=1 // pred_fallthru
      _
    // Predicated region
    $region6: #{tpu_custom_call.1} parent=1 // pred_check
      _
    $region7: #{tpu_custom_call.1} parent=1 // pred_check_branch
      %17 = sbr.rel (0) target = $region9
    $region8: #{tpu_custom_call.1} parent=1 // pred_region
      _
    $region9: #{tpu_custom_call.1} parent=1 // pred_fallthru
      _
    // Predicated region
    $region10: #{tpu_custom_call.1} parent=1 // pred_check
      _
    $region11: #{tpu_custom_call.1} parent=1 // pred_check_branch
      %19 = sbr.rel (0) target = $region13
    $region12: #{tpu_custom_call.1} parent=1 // pred_region
      _
    $region13: #{tpu_custom_call.1} parent=1 // pred_fallthru
      _
    // Predicated region
    $region14: #{tpu_custom_call.1} parent=1 // pred_check
      _
    $region15: #{tpu_custom_call.1} parent=1 // pred_check_branch
      %21 = sbr.rel (0) target = $region17
    $region16: #{tpu_custom_call.1} parent=1 // pred_region
      _
    $region17: #{tpu_custom_call.1} parent=1 // pred_fallthru
      _
    %v22 = vld [vmem:[%s0] sm:$0xff]
    %v23 = vld [vmem:[%s0 + $0x8] sm:$0xff]
    %v24 = vld [vmem:[%s0 + $0x10] sm:$0xff]
    %v25 = vld [vmem:[%s0 + $0x18] sm:$0xff]
    %v26 = vld [vmem:[%s0 + $0x20] sm:$0xff]
    %v27 = vld [vmem:[%s0 + $0x28] sm:$0xff]
    %v28 = vld [vmem:[%s0 + $0x30] sm:$0xff]
    %v29 = vld [vmem:[%s0 + $0x38] sm:$0xff]
    %v30 = vld [vmem:[%s0 + $0x40] sm:$0xff]
    %v31 = vld [vmem:[%s0 + $0x48] sm:$0xff]
    %v32 = vld [vmem:[%s0 + $0x50] sm:$0xff]
    %v33 = vld [vmem:[%s0 + $0x58] sm:$0xff]
    %v34 = vld [vmem:[%s0 + $0x60] sm:$0xff]
    %v35 = vld [vmem:[%s0 + $0x68] sm:$0xff]
    %v36 = vld [vmem:[%s0 + $0x70] sm:$0xff]
    %v37 = vld [vmem:[%s0 + $0x78] sm:$0xff]
    %v38 = vld [vmem:[%s0 + $0x80] sm:$0xff]
    %v39 = vld [vmem:[%s0 + $0x88] sm:$0xff]
    %v40 = vld [vmem:[%s0 + $0x90] sm:$0xff]
    %v41 = vld [vmem:[%s0 + $0x98] sm:$0xff]
    %v42 = vld [vmem:[%s0 + $0xa0] sm:$0xff]
    %v43 = vld [vmem:[%s0 + $0xa8] sm:$0xff]
    %v44 = vld [vmem:[%s0 + $0xb0] sm:$0xff]
    %v45 = vld [vmem:[%s0 + $0xb8] sm:$0xff]
    %v46 = vld [vmem:[%s1] sm:$0xf]
    %v47 = vld [vmem:[%s1 + $0x4] sm:$0xf]
    %v48 = vld [vmem:[%s1 + $0x8] sm:$0xf]
    %v49 = vld [vmem:[%s1 + $0xc] sm:$0xf]
    %v50 = vld [vmem:[%s1 + $0x10] sm:$0xf]
    %v51 = vld [vmem:[%s1 + $0x14] sm:$0xf]
    %v52 = vld [vmem:[%s1 + $0x18] sm:$0xf]
    %v53 = vld [vmem:[%s1 + $0x1c] sm:$0xf]
    %v54 = vld [vmem:[%s1 + $0x20] sm:$0xf]
    %v55 = vld [vmem:[%s1 + $0x24] sm:$0xf]
    %v56 = vld [vmem:[%s1 + $0x28] sm:$0xf]
    %v57 = vld [vmem:[%s1 + $0x2c] sm:$0xf]
    %v58 = vld [vmem:[%s1 + $0x30] sm:$0xf]
    %v59 = vld [vmem:[%s1 + $0x34] sm:$0xf]
    %v60 = vld [vmem:[%s1 + $0x38] sm:$0xf]
    %v61 = vld [vmem:[%s1 + $0x3c] sm:$0xf]
    %v62 = vld [vmem:[%s1 + $0x40] sm:$0xf]
    %v63 = vld [vmem:[%s1 + $0x44] sm:$0xf]
    %v64 = vld [vmem:[%s1 + $0x48] sm:$0xf]
    %v65 = vld [vmem:[%s1 + $0x4c] sm:$0xf]
    %v66 = vld [vmem:[%s1 + $0x50] sm:$0xf]
    %v67 = vld [vmem:[%s1 + $0x54] sm:$0xf]
    %v68 = vld [vmem:[%s1 + $0x58] sm:$0xf]
    %v69 = vld [vmem:[%s1 + $0x5c] sm:$0xf]
    %v70 = vld [vmem:[%s1 + $0x60] sm:$0xf]
    %v71 = vld [vmem:[%s1 + $0x64] sm:$0xf]
    %v72 = vld [vmem:[%s1 + $0x68] sm:$0xf]
    %v73 = vld [vmem:[%s1 + $0x6c] sm:$0xf]
    %v74 = vld [vmem:[%s1 + $0x70] sm:$0xf]
    %v75 = vld [vmem:[%s1 + $0x74] sm:$0xf]
    %v76 = vld [vmem:[%s1 + $0x78] sm:$0xf]
    %v77 = vld [vmem:[%s1 + $0x7c] sm:$0xf]
    %v78 = vld [vmem:[%s1 + $0x80] sm:$0xf]
    %v79 = vld [vmem:[%s1 + $0x84] sm:$0xf]
    %v80 = vld [vmem:[%s1 + $0x88] sm:$0xf]
    %v81 = vld [vmem:[%s1 + $0x8c] sm:$0xf]
    %v82 = vld [vmem:[%s1 + $0x90] sm:$0xf]
    %v83 = vld [vmem:[%s1 + $0x94] sm:$0xf]
    %v84 = vld [vmem:[%s1 + $0x98] sm:$0xf]
    %v85 = vld [vmem:[%s1 + $0x9c] sm:$0xf]
    %v86 = vld [vmem:[%s1 + $0xa0] sm:$0xf]
    %v87 = vld [vmem:[%s1 + $0xa4] sm:$0xf]
    %v88 = vld [vmem:[%s1 + $0xa8] sm:$0xf]
    %v89 = vld [vmem:[%s1 + $0xac] sm:$0xf]
    %v90 = vld [vmem:[%s1 + $0xb0] sm:$0xf]
    %v91 = vld [vmem:[%s1 + $0xb4] sm:$0xf]
    %v92 = vld [vmem:[%s1 + $0xb8] sm:$0xf]
    %v93 = vld [vmem:[%s1 + $0xbc] sm:$0xf]
    %v94 = vld [vmem:[%s1 + $0xc0] sm:$0xf]
    %v95 = vld [vmem:[%s1 + $0xc4] sm:$0xf]
    %v96 = vld [vmem:[%s1 + $0xc8] sm:$0xf]
    %v97 = vld [vmem:[%s1 + $0xcc] sm:$0xf]
    %v98 = vld [vmem:[%s1 + $0xd0] sm:$0xf]
    %v99 = vld [vmem:[%s1 + $0xd4] sm:$0xf]
    %v100 = vld [vmem:[%s1 + $0xd8] sm:$0xf]
    %v101 = vld [vmem:[%s1 + $0xdc] sm:$0xf]
    %v102 = vld [vmem:[%s1 + $0xe0] sm:$0xf]
    %v103 = vld [vmem:[%s1 + $0xe4] sm:$0xf]
    %v104 = vld [vmem:[%s1 + $0xe8] sm:$0xf]
    %v105 = vld [vmem:[%s1 + $0xec] sm:$0xf]
    %v106 = vld [vmem:[%s1 + $0xf0] sm:$0xf]
    %v107 = vld [vmem:[%s1 + $0xf4] sm:$0xf]
    %v108 = vld [vmem:[%s1 + $0xf8] sm:$0xf]
    %v109 = vld [vmem:[%s1 + $0xfc] sm:$0xf]
    %v110 = vld [vmem:[%s1 + $0x100] sm:$0xf]
    %v111 = vld [vmem:[%s1 + $0x104] sm:$0xf]
    %v112 = vld [vmem:[%s1 + $0x108] sm:$0xf]
    %v113 = vld [vmem:[%s1 + $0x10c] sm:$0xf]
    %v114 = vld [vmem:[%s1 + $0x110] sm:$0xf]
    %v115 = vld [vmem:[%s1 + $0x114] sm:$0xf]
    %v116 = vld [vmem:[%s1 + $0x118] sm:$0xf]
    %v117 = vld [vmem:[%s1 + $0x11c] sm:$0xf]
    %v118 = vld [vmem:[%s1 + $0x120] sm:$0xf]
    %v119 = vld [vmem:[%s1 + $0x124] sm:$0xf]
    %v120 = vld [vmem:[%s1 + $0x128] sm:$0xf]
    %v121 = vld [vmem:[%s1 + $0x12c] sm:$0xf]
    %v122 = vld [vmem:[%s1 + $0x130] sm:$0xf]
    %v123 = vld [vmem:[%s1 + $0x134] sm:$0xf]
    %v124 = vld [vmem:[%s1 + $0x138] sm:$0xf]
    %v125 = vld [vmem:[%s1 + $0x13c] sm:$0xf]
    %v126 = vld [vmem:[%s1 + $0x140] sm:$0xf]
    %v127 = vld [vmem:[%s1 + $0x144] sm:$0xf]
    %v128 = vld [vmem:[%s1 + $0x148] sm:$0xf]
    %v129 = vld [vmem:[%s1 + $0x14c] sm:$0xf]
    %v130 = vld [vmem:[%s1 + $0x150] sm:$0xf]
    %v131 = vld [vmem:[%s1 + $0x154] sm:$0xf]
    %v132 = vld [vmem:[%s1 + $0x158] sm:$0xf]
    %v133 = vld [vmem:[%s1 + $0x15c] sm:$0xf]
    %v134 = vld [vmem:[%s1 + $0x160] sm:$0xf]
    %v135 = vld [vmem:[%s1 + $0x164] sm:$0xf]
    %v136 = vld [vmem:[%s1 + $0x168] sm:$0xf]
    %v137 = vld [vmem:[%s1 + $0x16c] sm:$0xf]
    %v138 = vld [vmem:[%s1 + $0x170] sm:$0xf]
    %v139 = vld [vmem:[%s1 + $0x174] sm:$0xf]
    %v140 = vld [vmem:[%s1 + $0x178] sm:$0xf]
    %v141 = vld [vmem:[%s1 + $0x17c] sm:$0xf]
    %v142 = vld [vmem:[%s1 + $0x180] sm:$0xf]
    %v143 = vld [vmem:[%s1 + $0x184] sm:$0xf]
    %v144 = vld [vmem:[%s1 + $0x188] sm:$0xf]
    %v145 = vld [vmem:[%s1 + $0x18c] sm:$0xf]
    %v146 = vld [vmem:[%s1 + $0x190] sm:$0xf]
    %v147 = vld [vmem:[%s1 + $0x194] sm:$0xf]
    %v148 = vld [vmem:[%s1 + $0x198] sm:$0xf]
    %v149 = vld [vmem:[%s1 + $0x19c] sm:$0xf]
    %v150 = vld [vmem:[%s1 + $0x1a0] sm:$0xf]
    %v151 = vld [vmem:[%s1 + $0x1a4] sm:$0xf]
    %v152 = vld [vmem:[%s1 + $0x1a8] sm:$0xf]
    %v153 = vld [vmem:[%s1 + $0x1ac] sm:$0xf]
    %v154 = vld [vmem:[%s1 + $0x1b0] sm:$0xf]
    %v155 = vld [vmem:[%s1 + $0x1b4] sm:$0xf]
    %v156 = vld [vmem:[%s1 + $0x1b8] sm:$0xf]
    %v157 = vld [vmem:[%s1 + $0x1bc] sm:$0xf]
    %v158 = vld [vmem:[%s1 + $0x1c0] sm:$0xf]
    %v159 = vld [vmem:[%s1 + $0x1c4] sm:$0xf]
    %v160 = vld [vmem:[%s1 + $0x1c8] sm:$0xf]
    %v161 = vld [vmem:[%s1 + $0x1cc] sm:$0xf]
    %v162 = vld [vmem:[%s1 + $0x1d0] sm:$0xf]
    %v163 = vld [vmem:[%s1 + $0x1d4] sm:$0xf]
    %v164 = vld [vmem:[%s1 + $0x1d8] sm:$0xf]
    %v165 = vld [vmem:[%s1 + $0x1dc] sm:$0xf]
    %v166 = vld [vmem:[%s1 + $0x1e0] sm:$0xf]
    %v167 = vld [vmem:[%s1 + $0x1e4] sm:$0xf]
    %v168 = vld [vmem:[%s1 + $0x1e8] sm:$0xf]
    %v169 = vld [vmem:[%s1 + $0x1ec] sm:$0xf]
    %v170 = vld [vmem:[%s1 + $0x1f0] sm:$0xf]
    %v171 = vld [vmem:[%s1 + $0x1f4] sm:$0xf]
    %v172 = vld [vmem:[%s1 + $0x1f8] sm:$0xf]
    %v173 = vld [vmem:[%s1 + $0x1fc] sm:$0xf]
    %v174 = vld [vmem:[%s1 + $0x200] sm:$0xf]
    %v175 = vld [vmem:[%s1 + $0x204] sm:$0xf]
    %v176 = vld [vmem:[%s1 + $0x208] sm:$0xf]
    %v177 = vld [vmem:[%s1 + $0x20c] sm:$0xf]
    %v178 = vld [vmem:[%s1 + $0x210] sm:$0xf]
    %v179 = vld [vmem:[%s1 + $0x214] sm:$0xf]
    %v180 = vld [vmem:[%s1 + $0x218] sm:$0xf]
    %v181 = vld [vmem:[%s1 + $0x21c] sm:$0xf]
    %v182 = vld [vmem:[%s1 + $0x220] sm:$0xf]
    %v183 = vld [vmem:[%s1 + $0x224] sm:$0xf]
    %v184 = vld [vmem:[%s1 + $0x228] sm:$0xf]
    %v185 = vld [vmem:[%s1 + $0x22c] sm:$0xf]
    %v186 = vld [vmem:[%s1 + $0x230] sm:$0xf]
    %v187 = vld [vmem:[%s1 + $0x234] sm:$0xf]
    %v188 = vld [vmem:[%s1 + $0x238] sm:$0xf]
    %v189 = vld [vmem:[%s1 + $0x23c] sm:$0xf]
    %v190 = vld [vmem:[%s1 + $0x240] sm:$0xf]
    %v191 = vld [vmem:[%s1 + $0x244] sm:$0xf]
    %v192 = vld [vmem:[%s1 + $0x248] sm:$0xf]
    %v193 = vld [vmem:[%s1 + $0x24c] sm:$0xf]
    %v194 = vld [vmem:[%s1 + $0x250] sm:$0xf]
    %v195 = vld [vmem:[%s1 + $0x254] sm:$0xf]
    %v196 = vld [vmem:[%s1 + $0x258] sm:$0xf]
    %v197 = vld [vmem:[%s1 + $0x25c] sm:$0xf]
    %v198 = vld [vmem:[%s1 + $0x260] sm:$0xf]
    %v199 = vld [vmem:[%s1 + $0x264] sm:$0xf]
    %v200 = vld [vmem:[%s1 + $0x268] sm:$0xf]
    %v201 = vld [vmem:[%s1 + $0x26c] sm:$0xf]
    %v202 = vld [vmem:[%s1 + $0x270] sm:$0xf]
    %v203 = vld [vmem:[%s1 + $0x274] sm:$0xf]
    %v204 = vld [vmem:[%s1 + $0x278] sm:$0xf]
    %v205 = vld [vmem:[%s1 + $0x27c] sm:$0xf]
    %v206 = vld [vmem:[%s1 + $0x280] sm:$0xf]
    %v207 = vld [vmem:[%s1 + $0x284] sm:$0xf]
    %v208 = vld [vmem:[%s1 + $0x288] sm:$0xf]
    %v209 = vld [vmem:[%s1 + $0x28c] sm:$0xf]
    %v210 = vld [vmem:[%s1 + $0x290] sm:$0xf]
    %v211 = vld [vmem:[%s1 + $0x294] sm:$0xf]
    %v212 = vld [vmem:[%s1 + $0x298] sm:$0xf]
    %v213 = vld [vmem:[%s1 + $0x29c] sm:$0xf]
    %v214 = vld [vmem:[%s1 + $0x2a0] sm:$0xf]
    %v215 = vld [vmem:[%s1 + $0x2a4] sm:$0xf]
    %v216 = vld [vmem:[%s1 + $0x2a8] sm:$0xf]
    %v217 = vld [vmem:[%s1 + $0x2ac] sm:$0xf]
    %v218 = vld [vmem:[%s1 + $0x2b0] sm:$0xf]
    %v219 = vld [vmem:[%s1 + $0x2b4] sm:$0xf]
    %v220 = vld [vmem:[%s1 + $0x2b8] sm:$0xf]
    %v221 = vld [vmem:[%s1 + $0x2bc] sm:$0xf]
    %v222 = vld [vmem:[%s1 + $0x2c0] sm:$0xf]
    %v223 = vld [vmem:[%s1 + $0x2c4] sm:$0xf]
    %v224 = vld [vmem:[%s1 + $0x2c8] sm:$0xf]
    %v225 = vld [vmem:[%s1 + $0x2cc] sm:$0xf]
    %v226 = vld [vmem:[%s1 + $0x2d0] sm:$0xf]
    %v227 = vld [vmem:[%s1 + $0x2d4] sm:$0xf]
    %v228 = vld [vmem:[%s1 + $0x2d8] sm:$0xf]
    %v229 = vld [vmem:[%s1 + $0x2dc] sm:$0xf]
    %v230 = vld [vmem:[%s1 + $0x2e0] sm:$0xf]
    %v231 = vld [vmem:[%s1 + $0x2e4] sm:$0xf]
    %v232 = vld [vmem:[%s1 + $0x2e8] sm:$0xf]
    %v233 = vld [vmem:[%s1 + $0x2ec] sm:$0xf]
    %v234 = vld [vmem:[%s1 + $0x2f0] sm:$0xf]
    %v235 = vld [vmem:[%s1 + $0x2f4] sm:$0xf]
    %v236 = vld [vmem:[%s1 + $0x2f8] sm:$0xf]
    %v237 = vld [vmem:[%s1 + $0x2fc] sm:$0xf]
    %v262 = vunpack.c.l.b16 %v22
    %v263 = vunpack.c.h.b16 %v22
    %v264 = vunpack.c.l.b16 %v23
    %v265 = vunpack.c.h.b16 %v23
    %v266 = vunpack.c.l.b16 %v24
    %v267 = vunpack.c.h.b16 %v24
    %v268 = vunpack.c.l.b16 %v25
    %v269 = vunpack.c.h.b16 %v25
    %v270 = vunpack.c.l.b16 %v26
    %v271 = vunpack.c.h.b16 %v26
    %v272 = vunpack.c.l.b16 %v27
    %v273 = vunpack.c.h.b16 %v27
    %v274 = vunpack.c.l.b16 %v28
    %v275 = vunpack.c.h.b16 %v28
    %v276 = vunpack.c.l.b16 %v29
    %v277 = vunpack.c.h.b16 %v29
    %v278 = vunpack.c.l.b16 %v30
    %v279 = vunpack.c.h.b16 %v30
    %v280 = vunpack.c.l.b16 %v31
    %v281 = vunpack.c.h.b16 %v31
    %v282 = vunpack.c.l.b16 %v32
    %v283 = vunpack.c.h.b16 %v32
    %v284 = vunpack.c.l.b16 %v33
    %v285 = vunpack.c.h.b16 %v33
    %v286 = vunpack.c.l.b16 %v34
    %v287 = vunpack.c.h.b16 %v34
    %v288 = vunpack.c.l.b16 %v35
    %v289 = vunpack.c.h.b16 %v35
    %v290 = vunpack.c.l.b16 %v36
    %v291 = vunpack.c.h.b16 %v36
    %v292 = vunpack.c.l.b16 %v37
    %v293 = vunpack.c.h.b16 %v37
    %v294 = vunpack.c.l.b16 %v38
    %v295 = vunpack.c.h.b16 %v38
    %v296 = vunpack.c.l.b16 %v39
    %v297 = vunpack.c.h.b16 %v39
    %v298 = vunpack.c.l.b16 %v40
    %v299 = vunpack.c.h.b16 %v40
    %v300 = vunpack.c.l.b16 %v41
    %v301 = vunpack.c.h.b16 %v41
    %v302 = vunpack.c.l.b16 %v42
    %v303 = vunpack.c.h.b16 %v42
    %v304 = vunpack.c.l.b16 %v43
    %v305 = vunpack.c.h.b16 %v43
    %v306 = vunpack.c.l.b16 %v44
    %v307 = vunpack.c.h.b16 %v44
    %v308 = vunpack.c.l.b16 %v45
    %v309 = vunpack.c.h.b16 %v45
    %v310 = vpack.c.b16 %v274, %v262
    %v311 = vpack.c.b16 %v275, %v263
    %v312 = vpack.c.b16 %v276, %v264
    %v313 = vpack.c.b16 %v277, %v265
    %v314 = vpack.c.b16 %v278, %v266
    %v315 = vpack.c.b16 %v279, %v267
    %v316 = vpack.c.b16 %v280, %v268
    %v317 = vpack.c.b16 %v281, %v269
    %v318 = vpack.c.b16 %v282, %v270
    %v319 = vpack.c.b16 %v283, %v271
    %v320 = vpack.c.b16 %v284, %v272
    %v321 = vpack.c.b16 %v285, %v273
    %v322 = vpack.c.b16 %v298, %v286
    %v323 = vpack.c.b16 %v299, %v287
    %v324 = vpack.c.b16 %v300, %v288
    %v325 = vpack.c.b16 %v301, %v289
    %v326 = vpack.c.b16 %v302, %v290
    %v327 = vpack.c.b16 %v303, %v291
    %v328 = vpack.c.b16 %v304, %v292
    %v329 = vpack.c.b16 %v305, %v293
    %v330 = vpack.c.b16 %v306, %v294
    %v331 = vpack.c.b16 %v307, %v295
    %v332 = vpack.c.b16 %v308, %v296
    %v333 = vpack.c.b16 %v309, %v297
    %v550 = vunpack.c.l.b16 %v46
    %v551 = vunpack.c.l.b16 %v47
    %v552 = vunpack.c.l.b16 %v48
    %v553 = vunpack.c.l.b16 %v49
    %v554 = vunpack.c.l.b16 %v50
    %v555 = vunpack.c.l.b16 %v51
    %v556 = vunpack.c.l.b16 %v52
    %v557 = vunpack.c.l.b16 %v53
    %v558 = vunpack.c.l.b16 %v54
    %v559 = vunpack.c.l.b16 %v55
    %v560 = vunpack.c.l.b16 %v56
    %v561 = vunpack.c.l.b16 %v57
    %v562 = vunpack.c.l.b16 %v58
    %v563 = vunpack.c.l.b16 %v59
    %v564 = vunpack.c.l.b16 %v60
    %v565 = vunpack.c.l.b16 %v61
    %v566 = vunpack.c.l.b16 %v62
    %v567 = vunpack.c.l.b16 %v63
    %v568 = vunpack.c.l.b16 %v64
    %v569 = vunpack.c.l.b16 %v65
    %v570 = vunpack.c.l.b16 %v66
    %v571 = vunpack.c.l.b16 %v67
    %v572 = vunpack.c.l.b16 %v68
    %v573 = vunpack.c.l.b16 %v69
    %v574 = vunpack.c.l.b16 %v70
    %v575 = vunpack.c.l.b16 %v71
    %v576 = vunpack.c.l.b16 %v72
    %v577 = vunpack.c.l.b16 %v73
    %v578 = vunpack.c.l.b16 %v74
    %v579 = vunpack.c.l.b16 %v75
    %v580 = vunpack.c.l.b16 %v76
    %v581 = vunpack.c.l.b16 %v77
    %v582 = vunpack.c.l.b16 %v78
    %v583 = vunpack.c.l.b16 %v79
    %v584 = vunpack.c.l.b16 %v80
    %v585 = vunpack.c.l.b16 %v81
    %v586 = vunpack.c.l.b16 %v82
    %v587 = vunpack.c.l.b16 %v83
    %v588 = vunpack.c.l.b16 %v84
    %v589 = vunpack.c.l.b16 %v85
    %v590 = vunpack.c.l.b16 %v86
    %v591 = vunpack.c.l.b16 %v87
    %v592 = vunpack.c.l.b16 %v88
    %v593 = vunpack.c.l.b16 %v89
    %v594 = vunpack.c.l.b16 %v90
    %v595 = vunpack.c.l.b16 %v91
    %v596 = vunpack.c.l.b16 %v92
    %v597 = vunpack.c.l.b16 %v93
    %v598 = vunpack.c.l.b16 %v94
    %v599 = vunpack.c.l.b16 %v95
    %v600 = vunpack.c.l.b16 %v96
    %v601 = vunpack.c.l.b16 %v97
    %v602 = vunpack.c.l.b16 %v98
    %v603 = vunpack.c.l.b16 %v99
    %v604 = vunpack.c.l.b16 %v100
    %v605 = vunpack.c.l.b16 %v101
    %v606 = vunpack.c.l.b16 %v102
    %v607 = vunpack.c.l.b16 %v103
    %v608 = vunpack.c.l.b16 %v104
    %v609 = vunpack.c.l.b16 %v105
    %v610 = vunpack.c.l.b16 %v106
    %v611 = vunpack.c.l.b16 %v107
    %v612 = vunpack.c.l.b16 %v108
    %v613 = vunpack.c.l.b16 %v109
    %v614 = vunpack.c.l.b16 %v110
    %v615 = vunpack.c.l.b16 %v111
    %v616 = vunpack.c.l.b16 %v112
    %v617 = vunpack.c.l.b16 %v113
    %v618 = vunpack.c.l.b16 %v114
    %v619 = vunpack.c.l.b16 %v115
    %v620 = vunpack.c.l.b16 %v116
    %v621 = vunpack.c.l.b16 %v117
    %v622 = vunpack.c.l.b16 %v118
    %v623 = vunpack.c.l.b16 %v119
    %v624 = vunpack.c.l.b16 %v120
    %v625 = vunpack.c.l.b16 %v121
    %v626 = vunpack.c.l.b16 %v122
    %v627 = vunpack.c.l.b16 %v123
    %v628 = vunpack.c.l.b16 %v124
    %v629 = vunpack.c.l.b16 %v125
    %v630 = vunpack.c.l.b16 %v126
    %v631 = vunpack.c.l.b16 %v127
    %v632 = vunpack.c.l.b16 %v128
    %v633 = vunpack.c.l.b16 %v129
    %v634 = vunpack.c.l.b16 %v130
    %v635 = vunpack.c.l.b16 %v131
    %v636 = vunpack.c.l.b16 %v132
    %v637 = vunpack.c.l.b16 %v133
    %v638 = vunpack.c.l.b16 %v134
    %v639 = vunpack.c.l.b16 %v135
    %v640 = vunpack.c.l.b16 %v136
    %v641 = vunpack.c.l.b16 %v137
    %v642 = vunpack.c.l.b16 %v138
    %v643 = vunpack.c.l.b16 %v139
    %v644 = vunpack.c.l.b16 %v140
    %v645 = vunpack.c.l.b16 %v141
    %v646 = vunpack.c.l.b16 %v142
    %v647 = vunpack.c.l.b16 %v143
    %v648 = vunpack.c.l.b16 %v144
    %v649 = vunpack.c.l.b16 %v145
    %v650 = vunpack.c.l.b16 %v146
    %v651 = vunpack.c.l.b16 %v147
    %v652 = vunpack.c.l.b16 %v148
    %v653 = vunpack.c.l.b16 %v149
    %v654 = vunpack.c.l.b16 %v150
    %v655 = vunpack.c.l.b16 %v151
    %v656 = vunpack.c.l.b16 %v152
    %v657 = vunpack.c.l.b16 %v153
    %v658 = vunpack.c.l.b16 %v154
    %v659 = vunpack.c.l.b16 %v155
    %v660 = vunpack.c.l.b16 %v156
    %v661 = vunpack.c.l.b16 %v157
    %v662 = vunpack.c.l.b16 %v158
    %v663 = vunpack.c.l.b16 %v159
    %v664 = vunpack.c.l.b16 %v160
    %v665 = vunpack.c.l.b16 %v161
    %v666 = vunpack.c.l.b16 %v162
    %v667 = vunpack.c.l.b16 %v163
    %v668 = vunpack.c.l.b16 %v164
    %v669 = vunpack.c.l.b16 %v165
    %v670 = vunpack.c.l.b16 %v166
    %v671 = vunpack.c.l.b16 %v167
    %v672 = vunpack.c.l.b16 %v168
    %v673 = vunpack.c.l.b16 %v169
    %v674 = vunpack.c.l.b16 %v170
    %v675 = vunpack.c.l.b16 %v171
    %v676 = vunpack.c.l.b16 %v172
    %v677 = vunpack.c.l.b16 %v173
    %v678 = vunpack.c.l.b16 %v174
    %v679 = vunpack.c.l.b16 %v175
    %v680 = vunpack.c.l.b16 %v176
    %v681 = vunpack.c.l.b16 %v177
    %v682 = vunpack.c.l.b16 %v178
    %v683 = vunpack.c.l.b16 %v179
    %v684 = vunpack.c.l.b16 %v180
    %v685 = vunpack.c.l.b16 %v181
    %v686 = vunpack.c.l.b16 %v182
    %v687 = vunpack.c.l.b16 %v183
    %v688 = vunpack.c.l.b16 %v184
    %v689 = vunpack.c.l.b16 %v185
    %v690 = vunpack.c.l.b16 %v186
    %v691 = vunpack.c.l.b16 %v187
    %v692 = vunpack.c.l.b16 %v188
    %v693 = vunpack.c.l.b16 %v189
    %v694 = vunpack.c.l.b16 %v190
    %v695 = vunpack.c.l.b16 %v191
    %v696 = vunpack.c.l.b16 %v192
    %v697 = vunpack.c.l.b16 %v193
    %v698 = vunpack.c.l.b16 %v194
    %v699 = vunpack.c.l.b16 %v195
    %v700 = vunpack.c.l.b16 %v196
    %v701 = vunpack.c.l.b16 %v197
    %v702 = vunpack.c.l.b16 %v198
    %v703 = vunpack.c.l.b16 %v199
    %v704 = vunpack.c.l.b16 %v200
    %v705 = vunpack.c.l.b16 %v201
    %v706 = vunpack.c.l.b16 %v202
    %v707 = vunpack.c.l.b16 %v203
    %v708 = vunpack.c.l.b16 %v204
    %v709 = vunpack.c.l.b16 %v205
    %v710 = vunpack.c.l.b16 %v206
    %v711 = vunpack.c.l.b16 %v207
    %v712 = vunpack.c.l.b16 %v208
    %v713 = vunpack.c.l.b16 %v209
    %v714 = vunpack.c.l.b16 %v210
    %v715 = vunpack.c.l.b16 %v211
    %v716 = vunpack.c.l.b16 %v212
    %v717 = vunpack.c.l.b16 %v213
    %v718 = vunpack.c.l.b16 %v214
    %v719 = vunpack.c.l.b16 %v215
    %v720 = vunpack.c.l.b16 %v216
    %v721 = vunpack.c.l.b16 %v217
    %v722 = vunpack.c.l.b16 %v218
    %v723 = vunpack.c.l.b16 %v219
    %v724 = vunpack.c.l.b16 %v220
    %v725 = vunpack.c.l.b16 %v221
    %v726 = vunpack.c.l.b16 %v222
    %v727 = vunpack.c.l.b16 %v223
    %v728 = vunpack.c.l.b16 %v224
    %v729 = vunpack.c.l.b16 %v225
    %v730 = vunpack.c.l.b16 %v226
    %v731 = vunpack.c.l.b16 %v227
    %v732 = vunpack.c.l.b16 %v228
    %v733 = vunpack.c.l.b16 %v229
    %v734 = vunpack.c.l.b16 %v230
    %v735 = vunpack.c.l.b16 %v231
    %v736 = vunpack.c.l.b16 %v232
    %v737 = vunpack.c.l.b16 %v233
    %v738 = vunpack.c.l.b16 %v234
    %v739 = vunpack.c.l.b16 %v235
    %v740 = vunpack.c.l.b16 %v236
    %v741 = vunpack.c.l.b16 %v237
    %v742 = vpack.c.b16 %v551, %v550
    %v743 = vpack.c.b16 %v553, %v552
    %v744 = vpack.c.b16 %v555, %v554
    %v745 = vpack.c.b16 %v557, %v556
    %v746 = vpack.c.b16 %v559, %v558
    %v747 = vpack.c.b16 %v561, %v560
    %v748 = vpack.c.b16 %v563, %v562
    %v749 = vpack.c.b16 %v565, %v564
    %v750 = vpack.c.b16 %v567, %v566
    %v751 = vpack.c.b16 %v569, %v568
    %v752 = vpack.c.b16 %v571, %v570
    %v753 = vpack.c.b16 %v573, %v572
    %v754 = vpack.c.b16 %v575, %v574
    %v755 = vpack.c.b16 %v577, %v576
    %v756 = vpack.c.b16 %v579, %v578
    %v757 = vpack.c.b16 %v581, %v580
    %v758 = vpack.c.b16 %v583, %v582
    %v759 = vpack.c.b16 %v585, %v584
    %v760 = vpack.c.b16 %v587, %v586
    %v761 = vpack.c.b16 %v589, %v588
    %v762 = vpack.c.b16 %v591, %v590
    %v763 = vpack.c.b16 %v593, %v592
    %v764 = vpack.c.b16 %v595, %v594
    %v765 = vpack.c.b16 %v597, %v596
    %v766 = vpack.c.b16 %v599, %v598
    %v767 = vpack.c.b16 %v601, %v600
    %v768 = vpack.c.b16 %v603, %v602
    %v769 = vpack.c.b16 %v605, %v604
    %v770 = vpack.c.b16 %v607, %v606
    %v771 = vpack.c.b16 %v609, %v608
    %v772 = vpack.c.b16 %v611, %v610
    %v773 = vpack.c.b16 %v613, %v612
    %v774 = vpack.c.b16 %v615, %v614
    %v775 = vpack.c.b16 %v617, %v616
    %v776 = vpack.c.b16 %v619, %v618
    %v777 = vpack.c.b16 %v621, %v620
    %v778 = vpack.c.b16 %v623, %v622
    %v779 = vpack.c.b16 %v625, %v624
    %v780 = vpack.c.b16 %v627, %v626
    %v781 = vpack.c.b16 %v629, %v628
    %v782 = vpack.c.b16 %v631, %v630
    %v783 = vpack.c.b16 %v633, %v632
    %v784 = vpack.c.b16 %v635, %v634
    %v785 = vpack.c.b16 %v637, %v636
    %v786 = vpack.c.b16 %v639, %v638
    %v787 = vpack.c.b16 %v641, %v640
    %v788 = vpack.c.b16 %v643, %v642
    %v789 = vpack.c.b16 %v645, %v644
    %v790 = vpack.c.b16 %v647, %v646
    %v791 = vpack.c.b16 %v649, %v648
    %v792 = vpack.c.b16 %v651, %v650
    %v793 = vpack.c.b16 %v653, %v652
    %v794 = vpack.c.b16 %v655, %v654
    %v795 = vpack.c.b16 %v657, %v656
    %v796 = vpack.c.b16 %v659, %v658
    %v797 = vpack.c.b16 %v661, %v660
    %v798 = vpack.c.b16 %v663, %v662
    %v799 = vpack.c.b16 %v665, %v664
    %v800 = vpack.c.b16 %v667, %v666
    %v801 = vpack.c.b16 %v669, %v668
    %v802 = vpack.c.b16 %v671, %v670
    %v803 = vpack.c.b16 %v673, %v672
    %v804 = vpack.c.b16 %v675, %v674
    %v805 = vpack.c.b16 %v677, %v676
    %v806 = vpack.c.b16 %v679, %v678
    %v807 = vpack.c.b16 %v681, %v680
    %v808 = vpack.c.b16 %v683, %v682
    %v809 = vpack.c.b16 %v685, %v684
    %v810 = vpack.c.b16 %v687, %v686
    %v811 = vpack.c.b16 %v689, %v688
    %v812 = vpack.c.b16 %v691, %v690
    %v813 = vpack.c.b16 %v693, %v692
    %v814 = vpack.c.b16 %v695, %v694
    %v815 = vpack.c.b16 %v697, %v696
    %v816 = vpack.c.b16 %v699, %v698
    %v817 = vpack.c.b16 %v701, %v700
    %v818 = vpack.c.b16 %v703, %v702
    %v819 = vpack.c.b16 %v705, %v704
    %v820 = vpack.c.b16 %v707, %v706
    %v821 = vpack.c.b16 %v709, %v708
    %v822 = vpack.c.b16 %v711, %v710
    %v823 = vpack.c.b16 %v713, %v712
    %v824 = vpack.c.b16 %v715, %v714
    %v825 = vpack.c.b16 %v717, %v716
    %v826 = vpack.c.b16 %v719, %v718
    %v827 = vpack.c.b16 %v721, %v720
    %v828 = vpack.c.b16 %v723, %v722
    %v829 = vpack.c.b16 %v725, %v724
    %v830 = vpack.c.b16 %v727, %v726
    %v831 = vpack.c.b16 %v729, %v728
    %v832 = vpack.c.b16 %v731, %v730
    %v833 = vpack.c.b16 %v733, %v732
    %v834 = vpack.c.b16 %v735, %v734
    %v835 = vpack.c.b16 %v737, %v736
    %v836 = vpack.c.b16 %v739, %v738
    %v837 = vpack.c.b16 %v741, %v740
    %934 = vmatpush.bf16.msra.mxu0 %v749
    %935 = vmatpush.bf16.msra.mxu0 %v748
    %936 = vmatpush.bf16.msra.mxu0 %v747
    %937 = vmatpush.bf16.msra.mxu0 %v746
    %938 = vmatpush.bf16.msra.mxu0 %v745
    %939 = vmatpush.bf16.msra.mxu0 %v744
    %940 = vmatpush.bf16.msra.mxu0 %v743
    %941 = vmatpush.bf16.msra.mxu0 %v742
    %942 = vmatmul.bf16.gmra.mxu0 %v310
    %v943 = vpop.f32.mrf.mxu0
    %v944 = vadd.f32 0.0, %v943
    %v945 = vpop.f32.mrf.mxu0
    %v946 = vadd.f32 0.0, %v945
    %947 = vmatmul.bf16.gmra.mxu0 %v322
    %v948 = vpop.f32.mrf.mxu0
    %v949 = vadd.f32 0.0, %v948
    %v950 = vpop.f32.mrf.mxu0
    %v951 = vadd.f32 0.0, %v950
    %952 = vdwg.mxu0
    %953 = vmatpush.bf16.msra.mxu0 %v757
    %954 = vmatpush.bf16.msra.mxu0 %v756
    %955 = vmatpush.bf16.msra.mxu0 %v755
    %956 = vmatpush.bf16.msra.mxu0 %v754
    %957 = vmatpush.bf16.msra.mxu0 %v753
    %958 = vmatpush.bf16.msra.mxu0 %v752
    %959 = vmatpush.bf16.msra.mxu0 %v751
    %960 = vmatpush.bf16.msra.mxu0 %v750
    %961 = vmatmul.bf16.gmra.mxu0 %v311
    %v962 = vpop.f32.mrf.mxu0
    %v963 = vadd.f32 %v944, %v962
    %v964 = vpop.f32.mrf.mxu0
    %v965 = vadd.f32 %v946, %v964
    %966 = vmatmul.bf16.gmra.mxu0 %v323
    %v967 = vpop.f32.mrf.mxu0
    %v968 = vadd.f32 %v949, %v967
    %v969 = vpop.f32.mrf.mxu0
    %v970 = vadd.f32 %v951, %v969
    %971 = vdwg.mxu0
    %972 = vmatpush.bf16.msra.mxu0 %v765
    %973 = vmatpush.bf16.msra.mxu0 %v764
    %974 = vmatpush.bf16.msra.mxu0 %v763
    %975 = vmatpush.bf16.msra.mxu0 %v762
    %976 = vmatpush.bf16.msra.mxu0 %v761
    %977 = vmatpush.bf16.msra.mxu0 %v760
    %978 = vmatpush.bf16.msra.mxu0 %v759
    %979 = vmatpush.bf16.msra.mxu0 %v758
    %980 = vmatmul.bf16.gmra.mxu0 %v312
    %v981 = vpop.f32.mrf.mxu0
    %v982 = vadd.f32 %v963, %v981
    %v983 = vpop.f32.mrf.mxu0
    %v984 = vadd.f32 %v965, %v983
    %985 = vmatmul.bf16.gmra.mxu0 %v324
    %v986 = vpop.f32.mrf.mxu0
    %v987 = vadd.f32 %v968, %v986
    %v988 = vpop.f32.mrf.mxu0
    %v989 = vadd.f32 %v970, %v988
    %990 = vdwg.mxu0
    %991 = vmatpush.bf16.msra.mxu0 %v773
    %992 = vmatpush.bf16.msra.mxu0 %v772
    %993 = vmatpush.bf16.msra.mxu0 %v771
    %994 = vmatpush.bf16.msra.mxu0 %v770
    %995 = vmatpush.bf16.msra.mxu0 %v769
    %996 = vmatpush.bf16.msra.mxu0 %v768
    %997 = vmatpush.bf16.msra.mxu0 %v767
    %998 = vmatpush.bf16.msra.mxu0 %v766
    %999 = vmatmul.bf16.gmra.mxu0 %v313
    %v1000 = vpop.f32.mrf.mxu0
    %v1001 = vadd.f32 %v982, %v1000
    %v1002 = vpop.f32.mrf.mxu0
    %v1003 = vadd.f32 %v984, %v1002
    %1004 = vmatmul.bf16.gmra.mxu0 %v325
    %v1005 = vpop.f32.mrf.mxu0
    %v1006 = vadd.f32 %v987, %v1005
    %v1007 = vpop.f32.mrf.mxu0
    %v1008 = vadd.f32 %v989, %v1007
    %1009 = vdwg.mxu0
    %1010 = vmatpush.bf16.msra.mxu0 %v781
    %1011 = vmatpush.bf16.msra.mxu0 %v780
    %1012 = vmatpush.bf16.msra.mxu0 %v779
    %1013 = vmatpush.bf16.msra.mxu0 %v778
    %1014 = vmatpush.bf16.msra.mxu0 %v777
    %1015 = vmatpush.bf16.msra.mxu0 %v776
    %1016 = vmatpush.bf16.msra.mxu0 %v775
    %1017 = vmatpush.bf16.msra.mxu0 %v774
    %1018 = vmatmul.bf16.gmra.mxu0 %v314
    %v1019 = vpop.f32.mrf.mxu0
    %v1020 = vadd.f32 %v1001, %v1019
    %v1021 = vpop.f32.mrf.mxu0
    %v1022 = vadd.f32 %v1003, %v1021
    %1023 = vmatmul.bf16.gmra.mxu0 %v326
    %v1024 = vpop.f32.mrf.mxu0
    %v1025 = vadd.f32 %v1006, %v1024
    %v1026 = vpop.f32.mrf.mxu0
    %v1027 = vadd.f32 %v1008, %v1026
    %1028 = vdwg.mxu0
    %1029 = vmatpush.bf16.msra.mxu0 %v789
    %1030 = vmatpush.bf16.msra.mxu0 %v788
    %1031 = vmatpush.bf16.msra.mxu0 %v787
    %1032 = vmatpush.bf16.msra.mxu0 %v786
    %1033 = vmatpush.bf16.msra.mxu0 %v785
    %1034 = vmatpush.bf16.msra.mxu0 %v784
    %1035 = vmatpush.bf16.msra.mxu0 %v783
    %1036 = vmatpush.bf16.msra.mxu0 %v782
    %1037 = vmatmul.bf16.gmra.mxu0 %v315
    %v1038 = vpop.f32.mrf.mxu0
    %v1039 = vadd.f32 %v1020, %v1038
    %v1040 = vpop.f32.mrf.mxu0
    %v1041 = vadd.f32 %v1022, %v1040
    %1042 = vmatmul.bf16.gmra.mxu0 %v327
    %v1043 = vpop.f32.mrf.mxu0
    %v1044 = vadd.f32 %v1025, %v1043
    %v1045 = vpop.f32.mrf.mxu0
    %v1046 = vadd.f32 %v1027, %v1045
    %1047 = vdwg.mxu0
    %1048 = vmatpush.bf16.msra.mxu0 %v797
    %1049 = vmatpush.bf16.msra.mxu0 %v796
    %1050 = vmatpush.bf16.msra.mxu0 %v795
    %1051 = vmatpush.bf16.msra.mxu0 %v794
    %1052 = vmatpush.bf16.msra.mxu0 %v793
    %1053 = vmatpush.bf16.msra.mxu0 %v792
    %1054 = vmatpush.bf16.msra.mxu0 %v791
    %1055 = vmatpush.bf16.msra.mxu0 %v790
    %1056 = vmatmul.bf16.gmra.mxu0 %v316
    %v1057 = vpop.f32.mrf.mxu0
    %v1058 = vadd.f32 %v1039, %v1057
    %v1059 = vpop.f32.mrf.mxu0
    %v1060 = vadd.f32 %v1041, %v1059
    %1061 = vmatmul.bf16.gmra.mxu0 %v328
    %v1062 = vpop.f32.mrf.mxu0
    %v1063 = vadd.f32 %v1044, %v1062
    %v1064 = vpop.f32.mrf.mxu0
    %v1065 = vadd.f32 %v1046, %v1064
    %1066 = vdwg.mxu0
    %1067 = vmatpush.bf16.msra.mxu0 %v805
    %1068 = vmatpush.bf16.msra.mxu0 %v804
    %1069 = vmatpush.bf16.msra.mxu0 %v803
    %1070 = vmatpush.bf16.msra.mxu0 %v802
    %1071 = vmatpush.bf16.msra.mxu0 %v801
    %1072 = vmatpush.bf16.msra.mxu0 %v800
    %1073 = vmatpush.bf16.msra.mxu0 %v799
    %1074 = vmatpush.bf16.msra.mxu0 %v798
    %1075 = vmatmul.bf16.gmra.mxu0 %v317
    %v1076 = vpop.f32.mrf.mxu0
    %v1077 = vadd.f32 %v1058, %v1076
    %v1078 = vpop.f32.mrf.mxu0
    %v1079 = vadd.f32 %v1060, %v1078
    %1080 = vmatmul.bf16.gmra.mxu0 %v329
    %v1081 = vpop.f32.mrf.mxu0
    %v1082 = vadd.f32 %v1063, %v1081
    %v1083 = vpop.f32.mrf.mxu0
    %v1084 = vadd.f32 %v1065, %v1083
    %1085 = vdwg.mxu0
    %1086 = vmatpush.bf16.msra.mxu0 %v813
    %1087 = vmatpush.bf16.msra.mxu0 %v812
    %1088 = vmatpush.bf16.msra.mxu0 %v811
    %1089 = vmatpush.bf16.msra.mxu0 %v810
    %1090 = vmatpush.bf16.msra.mxu0 %v809
    %1091 = vmatpush.bf16.msra.mxu0 %v808
    %1092 = vmatpush.bf16.msra.mxu0 %v807
    %1093 = vmatpush.bf16.msra.mxu0 %v806
    %1094 = vmatmul.bf16.gmra.mxu0 %v318
    %v1095 = vpop.f32.mrf.mxu0
    %v1096 = vadd.f32 %v1077, %v1095
    %v1097 = vpop.f32.mrf.mxu0
    %v1098 = vadd.f32 %v1079, %v1097
    %1099 = vmatmul.bf16.gmra.mxu0 %v330
    %v1100 = vpop.f32.mrf.mxu0
    %v1101 = vadd.f32 %v1082, %v1100
    %v1102 = vpop.f32.mrf.mxu0
    %v1103 = vadd.f32 %v1084, %v1102
    %1104 = vdwg.mxu0
    %1105 = vmatpush.bf16.msra.mxu0 %v821
    %1106 = vmatpush.bf16.msra.mxu0 %v820
    %1107 = vmatpush.bf16.msra.mxu0 %v819
    %1108 = vmatpush.bf16.msra.mxu0 %v818
    %1109 = vmatpush.bf16.msra.mxu0 %v817
    %1110 = vmatpush.bf16.msra.mxu0 %v816
    %1111 = vmatpush.bf16.msra.mxu0 %v815
    %1112 = vmatpush.bf16.msra.mxu0 %v814
    %1113 = vmatmul.bf16.gmra.mxu0 %v319
    %v1114 = vpop.f32.mrf.mxu0
    %v1115 = vadd.f32 %v1096, %v1114
    %v1116 = vpop.f32.mrf.mxu0
    %v1117 = vadd.f32 %v1098, %v1116
    %1118 = vmatmul.bf16.gmra.mxu0 %v331
    %v1119 = vpop.f32.mrf.mxu0
    %v1120 = vadd.f32 %v1101, %v1119
    %v1121 = vpop.f32.mrf.mxu0
    %v1122 = vadd.f32 %v1103, %v1121
    %1123 = vdwg.mxu0
    %1124 = vmatpush.bf16.msra.mxu0 %v829
    %1125 = vmatpush.bf16.msra.mxu0 %v828
    %1126 = vmatpush.bf16.msra.mxu0 %v827
    %1127 = vmatpush.bf16.msra.mxu0 %v826
    %1128 = vmatpush.bf16.msra.mxu0 %v825
    %1129 = vmatpush.bf16.msra.mxu0 %v824
    %1130 = vmatpush.bf16.msra.mxu0 %v823
    %1131 = vmatpush.bf16.msra.mxu0 %v822
    %1132 = vmatmul.bf16.gmra.mxu0 %v320
    %v1133 = vpop.f32.mrf.mxu0
    %v1134 = vadd.f32 %v1115, %v1133
    %v1135 = vpop.f32.mrf.mxu0
    %v1136 = vadd.f32 %v1117, %v1135
    %1137 = vmatmul.bf16.gmra.mxu0 %v332
    %v1138 = vpop.f32.mrf.mxu0
    %v1139 = vadd.f32 %v1120, %v1138
    %v1140 = vpop.f32.mrf.mxu0
    %v1141 = vadd.f32 %v1122, %v1140
    %1142 = vdwg.mxu0
    %1143 = vmatpush.bf16.msra.mxu0 %v837
    %1144 = vmatpush.bf16.msra.mxu0 %v836
    %1145 = vmatpush.bf16.msra.mxu0 %v835
    %1146 = vmatpush.bf16.msra.mxu0 %v834
    %1147 = vmatpush.bf16.msra.mxu0 %v833
    %1148 = vmatpush.bf16.msra.mxu0 %v832
    %1149 = vmatpush.bf16.msra.mxu0 %v831
    %1150 = vmatpush.bf16.msra.mxu0 %v830
    %1151 = vmatmul.bf16.gmra.mxu0 %v321
    %v1152 = vpop.f32.mrf.mxu0
    %v1153 = vadd.f32 %v1134, %v1152
    %v1154 = vpop.f32.mrf.mxu0
    %v1155 = vadd.f32 %v1136, %v1154
    %1156 = vmatmul.bf16.gmra.mxu0 %v333
    %v1157 = vpop.f32.mrf.mxu0
    %v1158 = vadd.f32 %v1139, %v1157
    %v1159 = vpop.f32.mrf.mxu0
    %v1160 = vadd.f32 %v1141, %v1159
    %1161 = vdwg.mxu0
    %v1162 = vpack.c.bf16 %v1153, %v1153
    %v1163 = vpack.c.bf16 %v1155, %v1155
    %v1164 = vpack.c.bf16 %v1158, %v1158
    %v1165 = vpack.c.bf16 %v1160, %v1160
    %vm1166 = vcmask 519168
    %1167 = vst.msk [vmem:[#allocation2] sm:$0xf] %vm1166, %v1162
    %1168 = vst.msk [vmem:[#allocation2 + $0x4] sm:$0xf] %vm1166, %v1163
    %1169 = vst.msk [vmem:[#allocation2 + $0x8] sm:$0xf] %vm1166, %v1164
    %1170 = vst.msk [vmem:[#allocation2 + $0xc] sm:$0xf] %vm1166, %v1165
    %v1171 = vld [vmem:[%s2] sm:$0xff]
    %vm1172 = vcmask 523264
    %v1174 = vsel %vm1172, %v1171, 0
    %v1177 = vsel %vm1172, %v1153, 0
    %v1180 = vsel %vm1172, %v1155, 0
    %v1183 = vsel %vm1172, %v1158, 0
    %v1186 = vsel %vm1172, %v1160, 0
    %1188 = vmatpush.xpose.msra.mxu0 0.0
    %1189 = vmatpush.xpose.msra.mxu0 0.0
    %1190 = vmatpush.xpose.msra.mxu0 0.0
    %1191 = vmatpush.xpose.msra.mxu0 0.0
    %1192 = vmatpush.xpose.msra.mxu0 0.0
    %1193 = vmatpush.xpose.msra.mxu0 0.0
    %1194 = vmatpush.xpose.msra.mxu0 0.0
    %1195 = vmatpush.xpose.msra.mxu0 0.0
    %1196 = vmatpush.xpose.msra.mxu0 0.0
    %1197 = vmatpush.xpose.msra.mxu0 0.0
    %1198 = vmatpush.xpose.msra.mxu0 0.0
    %1199 = vmatpush.xpose.msra.mxu0 0.0
    %1200 = vmatpush.xpose.msra.mxu0 %v1186
    %1201 = vmatpush.xpose.msra.mxu0 %v1183
    %1202 = vmatpush.xpose.msra.mxu0 %v1180
    %1203 = vmatpush.xpose.msra.mxu0 %v1177
    %1204 = vmatmul.f32.gmra.mxu0 %v1174
    %v1205 = vpop.f32.mrf.mxu0
    %v1206 = vadd.f32 0.0, %v1205
    %1207 = vdwg.mxu0
    %vm1208 = vcmask 261120
    %1209 = vst.msk [vmem:[#allocation4] sm:$0xff] %vm1208, %v1206
    %v1210 = vld [vmem:[%s3] sm:$0xff]
    %v1212 = vsel %vm1172, %v1210, 0
    %1214 = vmatpush.xpose.msra.mxu0 0.0
    %1215 = vmatpush.xpose.msra.mxu0 0.0
    %1216 = vmatpush.xpose.msra.mxu0 0.0
    %1217 = vmatpush.xpose.msra.mxu0 0.0
    %1218 = vmatpush.xpose.msra.mxu0 0.0
    %1219 = vmatpush.xpose.msra.mxu0 0.0
    %1220 = vmatpush.xpose.msra.mxu0 0.0
    %1221 = vmatpush.xpose.msra.mxu0 0.0
    %1222 = vmatpush.xpose.msra.mxu0 0.0
    %1223 = vmatpush.xpose.msra.mxu0 0.0
    %1224 = vmatpush.xpose.msra.mxu0 0.0
    %1225 = vmatpush.xpose.msra.mxu0 0.0
    %1226 = vmatpush.xpose.msra.mxu0 0.0
    %1227 = vmatpush.xpose.msra.mxu0 0.0
    %1228 = vmatpush.xpose.msra.mxu0 0.0
    %1229 = vmatpush.xpose.msra.mxu0 %v1212
    %1230 = vmatmul.f32.gmra.mxu0 %v1177
    %v1231 = vpop.f32.mrf.mxu0
    %v1232 = vadd.f32 0.0, %v1231
    %1233 = vmatmul.f32.gmra.mxu0 %v1180
    %v1234 = vpop.f32.mrf.mxu0
    %v1235 = vadd.f32 0.0, %v1234
    %1236 = vmatmul.f32.gmra.mxu0 %v1183
    %v1237 = vpop.f32.mrf.mxu0
    %v1238 = vadd.f32 0.0, %v1237
    %1239 = vmatmul.f32.gmra.mxu0 %v1186
    %v1240 = vpop.f32.mrf.mxu0
    %v1241 = vadd.f32 0.0, %v1240
    %1242 = vdwg.mxu0
    %vm1243 = vcmask 64512
    %1244 = vst.msk [vmem:[%s6] sm:$0xff] %vm1243, %v1232
    %1245 = vst.msk [vmem:[%s6 + $0x8] sm:$0xff] %vm1243, %v1235
    %1246 = vst.msk [vmem:[%s6 + $0x10] sm:$0xff] %vm1243, %v1238
    %1247 = vst.msk [vmem:[%s6 + $0x18] sm:$0xff] %vm1243, %v1241
    // Predicated region
    $region18: #{tpu_custom_call.1} parent=1 // pred_check
      _
    $region19: #{tpu_custom_call.1} parent=1 // pred_check_branch
      %1249 = sbr.rel (0) target = $region21
    $region20: #{tpu_custom_call.1} parent=1 // pred_region
      %1251 = vsyncadd [#allocation3], 0
      %s1252 = sshll.u32 [#allocation2], 4
      %s1253 = int_to_ptr.vmem [resolvable:$true] %s1252
      %s1254 = sshll.u32 %s4, 4
      %s1255 = int_to_ptr.hbm [resolvable:$true] %s1254
      %1260 = dma.vmem_to_hbm [thread:$0]  %s1253, 256, %s1255, [#allocation3], 64, 64, 4
    $region21: #{tpu_custom_call.1} parent=1 // pred_fallthru
      _
    // Predicated region
    $region22: #{tpu_custom_call.1} parent=1 // pred_check
      _
    $region23: #{tpu_custom_call.1} parent=1 // pred_check_branch
      %1262 = sbr.rel (0) target = $region25
    $region24: #{tpu_custom_call.1} parent=1 // pred_region
      %1264 = vsyncadd [#allocation5], 0
      %s1266 = sshll.u32 [#allocation4], 4
      %s1267 = int_to_ptr.vmem [resolvable:$true] %s1266
      %s1268 = sshll.u32 %s5, 4
      %s1269 = int_to_ptr.hbm [resolvable:$true] %s1268
      %1271 = dma.vmem_to_hbm [thread:$0]  %s1267, 128, %s1269, [#allocation5]
    $region25: #{tpu_custom_call.1} parent=1 // pred_fallthru
      _
    // Predicated region
    $region26: #{tpu_custom_call.1} parent=1 // pred_check
      _
    $region27: #{tpu_custom_call.1} parent=1 // pred_check_branch
      %1273 = sbr.rel (0) target = $region29
    $region28: #{tpu_custom_call.1} parent=1 // pred_region
      _
    $region29: #{tpu_custom_call.1} parent=1 // pred_fallthru
      _
    // Predicated region
    $region30: #{tpu_custom_call.1} parent=1 // pred_check
      _
    $region31: #{tpu_custom_call.1} parent=1 // pred_check_branch
      %1275 = sbr.rel (0) target = $region33
    $region32: #{tpu_custom_call.1} parent=1 // pred_region
      %1277 = dma.done [#allocation3], 256
    $region33: #{tpu_custom_call.1} parent=1 // pred_fallthru
      _
    // Predicated region
    $region34: #{tpu_custom_call.1} parent=1 // pred_check
      _
    $region35: #{tpu_custom_call.1} parent=1 // pred_check_branch
      %1279 = sbr.rel (0) target = $region37
    $region36: #{tpu_custom_call.1} parent=1 // pred_region
      %1281 = dma.done [#allocation5], 128
    $region37: #{tpu_custom_call.1} parent=1 // pred_fallthru
      _
    // Predicated region
    $region38: #{tpu_custom_call.1} parent=1 // pred_check
      _
    $region39: #{tpu_custom_call.1} parent=1 // pred_check_branch
      %1283 = sbr.rel (0) target = $region41
    $region40: #{tpu_custom_call.1} parent=1 // pred_region
      _
    $region41: #{tpu_custom_call.1} parent=1 // pred_fallthru
      _
    %1284 = vsyncpa [#allocation3], 1
    %1285 = vsyncpa [#allocation5], 1

</llo_original>
